<compile_context>
chip_gen: v5e
topology: v5e:2x2
jax: 0.10.0
libtpu: 0.0.40
codegen_flags: <defaults>
</compile_context>

<pallas_src>
import jax
import jax.numpy as jnp
from jax.experimental import pallas as pl
from jax.experimental.pallas import tpu as pltpu


def _round_up(x, m):
    return (x + m - 1) // m * m


def _nw_kernel(w_ref, q_ref, k_ref, v_ref, o_ref):
    # w_ref: SMEM (1,) f32 scalar bandwidth parameter
    # q_ref: VMEM (TQ, 1) query column
    # k_ref: VMEM (TQ, K) keys   (native layout: queries on sublanes, K on lanes)
    # v_ref: VMEM (TQ, K) values
    # o_ref: VMEM (TQ, 1) output column
    w = w_ref[0]
    w2 = -0.5 * w * w                               # fold -1/2 and w^2 into one scalar

    q = q_ref[...].astype(jnp.float32)              # (TQ, 1)
    k = k_ref[...].astype(jnp.float32)              # (TQ, K)
    v = v_ref[...].astype(jnp.float32)              # (TQ, K)

    dd = q - k                                      # lane-broadcast (TQ,1) vs (TQ,K)
    s = dd * dd * w2                                # scores, always <= 0

    # Numerically-stable softmax along the key (lane) axis with the
    # normalization fused into the weighted sum (no full attn tile stored).
    m = jnp.max(s, axis=-1, keepdims=True)          # (TQ, 1)
    e = jnp.exp(s - m)                              # (TQ, K)
    num = jnp.sum(e * v, axis=-1, keepdims=True)    # (TQ, 1)
    den = jnp.sum(e, axis=-1, keepdims=True)        # (TQ, 1), >= 1 due to max-sub
    o_ref[...] = num / den                          # exact divide (accuracy)


def nw_kernel_regression(w, queries, keys, values, *, tq=None):
    """w: (1,); queries: (Q,); keys, values: (Q, K). Returns (Q,) f32."""
    Q, K = keys.shape
    w = w.astype(jnp.float32).reshape(1)
    q2 = queries.reshape(Q, 1)                      # native layout, no extra HBM pass

    # --- query-tile size: big enough to amortize the ~0.35us/step overhead,
    # small enough that the double-buffered working set stays well under VMEM
    # (conservative for v7x's 64 MiB physical VMEM). Footprint uses the
    # lane-padded key width and the lane-padded (TQ,1) q/out columns.
    Kp = max(128, _round_up(K, 128))                # lane-padded key width in VMEM
    per_row = 2 * 4 * (2 * Kp + 2 * 128)            # 2 bufs * 4B * (k + v + q + out)
    if tq is None:
        budget = 16 * 1024 * 1024
        tq = (budget // per_row) // 256 * 256
        tq = max(256, min(4096, tq))
        # keep >= 2 grid steps when there is enough work (feeds both v7x TCs)
        if Q > 2 * 256:
            tq = min(tq, _round_up(pl.cdiv(Q, 2), 256))
    if tq >= Q:
        tq = Q                                      # single block; dims == full array dims
    grid = (pl.cdiv(Q, tq),)

    # VMEM request: double-buffered tiles (padded) with 2x headroom.
    est = per_row * _round_up(tq, 8) + (1 << 20)
    vmem_limit = int(min(40 * 1024 * 1024, max(8 * 1024 * 1024, 2 * est)))

    out = pl.pallas_call(
        _nw_kernel,
        out_shape=jax.ShapeDtypeStruct((Q, 1), jnp.float32),
        grid=grid,
        in_specs=[
            pl.BlockSpec(memory_space=pltpu.SMEM),        # w (scalar parameter)
            pl.BlockSpec((tq, 1), lambda i: (i, 0)),      # queries (Q, 1)
            pl.BlockSpec((tq, K), lambda i: (i, 0)),      # keys    (Q, K), native layout
            pl.BlockSpec((tq, K), lambda i: (i, 0)),      # values  (Q, K)
        ],
        out_specs=pl.BlockSpec((tq, 1), lambda i: (i, 0)),
        compiler_params=pltpu.CompilerParams(
            dimension_semantics=("parallel",),
            vmem_limit_bytes=vmem_limit,
        ),
    )(w, q2, keys, values)
    return out[:, 0]


def _f(x):
    return 2.0 * jnp.sin(x) + x ** 0.8


def _reference(w, queries, keys, values):
    q = jnp.broadcast_to(queries[:, None], keys.shape)
    s = -((q - keys) * w[0]) ** 2 / 2.0
    attn = jax.nn.softmax(s, axis=1)
    return jnp.sum(attn * values, axis=1)


if __name__ == "__main__":
    n_train = 50

    key = jax.random.PRNGKey(0)
    k_w, k_x, k_noise = jax.random.split(key, 3)

    # parameter: torch.rand((1,)) -> uniform [0, 1)
    w = jax.random.uniform(k_w, (1,), dtype=jnp.float32)

    # training data (as in the surrounding script)
    x_train = jnp.sort(jax.random.uniform(k_x, (n_train,), dtype=jnp.float32) * 5.0)
    y_train = _f(x_train) + 0.5 * jax.random.normal(k_noise, (n_train,), dtype=jnp.float32)

    # test queries: arange(0, 5, 0.1) -> 50 points
    x_test = jnp.arange(0.0, 5.0, 0.1, dtype=jnp.float32)
    n_test = x_test.shape[0]

    keys = jnp.tile(x_train[None, :], (n_test, 1))      # (n_test, n_train)
    values = jnp.tile(y_train[None, :], (n_test, 1))    # (n_test, n_train)

    out = nw_kernel_regression(w, x_test, keys, values)
    out = jax.block_until_ready(out)

    ref = _reference(w, x_test, keys, values)
    assert out.shape == (n_test,)
    err = float(jnp.max(jnp.abs(out - ref)))
    assert jnp.allclose(out, ref, atol=1e-5, rtol=1e-5), err

    print("KERNEL_OK")
</pallas_src>

<mosaic_0001>
module attributes {stable_mosaic.version = 11 : i64} {
  func.func @_nw_kernel(%arg0: i32, %arg1: memref<1xf32, #tpu.memory_space<smem>>, %arg2: memref<50x1xf32, #tpu.memory_space<vmem>>, %arg3: memref<50x50xf32, #tpu.memory_space<vmem>>, %arg4: memref<50x50xf32, #tpu.memory_space<vmem>>, %arg5: memref<50x1xf32, #tpu.memory_space<vmem>>) attributes {dimension_semantics = [#tpu.dimension_semantics<parallel>], iteration_bounds = array<i64: 1>, scalar_prefetch = 0 : i64, scratch_operands = 0 : i64, tpu.core_type = #tpu.core_type<tc>, window_params = [{transform_indices = @transform_0, window_bounds = array<i64: 1>}, {transform_indices = @transform_1, window_bounds = array<i64: 50, 1>}, {transform_indices = @transform_2, window_bounds = array<i64: 50, 50>}, {transform_indices = @transform_3, window_bounds = array<i64: 50, 50>}, {transform_indices = @transform_4, window_bounds = array<i64: 50, 1>}]} {
    %c0 = arith.constant 0 : index
    %0 = memref.load %arg1[%c0] : memref<1xf32, #tpu.memory_space<smem>>
    %cst = arith.constant -5.000000e-01 : f32
    %1 = arith.mulf %cst, %0 : f32
    %2 = arith.mulf %1, %0 : f32
    %c0_0 = arith.constant 0 : index
    %c0_1 = arith.constant 0 : index
    %3 = vector.load %arg2[%c0_0, %c0_1] : memref<50x1xf32, #tpu.memory_space<vmem>>, vector<50x1xf32>
    %c0_2 = arith.constant 0 : index
    %c0_3 = arith.constant 0 : index
    %4 = vector.load %arg3[%c0_2, %c0_3] : memref<50x50xf32, #tpu.memory_space<vmem>>, vector<50x50xf32>
    %c0_4 = arith.constant 0 : index
    %c0_5 = arith.constant 0 : index
    %5 = vector.load %arg4[%c0_4, %c0_5] : memref<50x50xf32, #tpu.memory_space<vmem>>, vector<50x50xf32>
    %6 = vector.broadcast %3 : vector<50x1xf32> to vector<50x50xf32>
    %7 = arith.subf %6, %4 : vector<50x50xf32>
    %8 = arith.mulf %7, %7 : vector<50x50xf32>
    %9 = vector.broadcast %2 : f32 to vector<50x50xf32>
    %10 = arith.mulf %8, %9 : vector<50x50xf32>
    %cst_6 = arith.constant dense<0xFF800000> : vector<50xf32>
    %11 = vector.multi_reduction <maximumf>, %10, %cst_6 [1] : vector<50x50xf32> to vector<50xf32>
    %12 = vector.shape_cast %11 : vector<50xf32> to vector<50x1xf32>
    %13 = vector.broadcast %12 : vector<50x1xf32> to vector<50x50xf32>
    %14 = arith.subf %10, %13 : vector<50x50xf32>
    %15 = math.exp %14 : vector<50x50xf32>
    %16 = arith.mulf %15, %5 : vector<50x50xf32>
    %cst_7 = arith.constant dense<0.000000e+00> : vector<50xf32>
    %17 = vector.multi_reduction <add>, %16, %cst_7 [1] : vector<50x50xf32> to vector<50xf32>
    %18 = vector.shape_cast %17 : vector<50xf32> to vector<50x1xf32>
    %cst_8 = arith.constant dense<0.000000e+00> : vector<50xf32>
    %19 = vector.multi_reduction <add>, %15, %cst_8 [1] : vector<50x50xf32> to vector<50xf32>
    %20 = vector.shape_cast %19 : vector<50xf32> to vector<50x1xf32>
    %21 = arith.divf %18, %20 : vector<50x1xf32>
    %c0_9 = arith.constant 0 : index
    %c0_10 = arith.constant 0 : index
    %22 = vector.load %arg5[%c0_9, %c0_10] : memref<50x1xf32, #tpu.memory_space<vmem>>, vector<50x1xf32>
    tpu.vector_store %arg5[%c0_9, %c0_10], %21 {strides = array<i32>} : memref<50x1xf32, #tpu.memory_space<vmem>>, vector<50x1xf32>,
    return
  }
  func.func @transform_0(%arg0: i32) -> i32 {
    %c0_i32 = arith.constant 0 : i32
    %c0_i32_0 = arith.constant 0 : i32
    return %c0_i32 : i32
  }
  func.func @transform_1(%arg0: i32) -> (i32, i32) {
    %c0_i32 = arith.constant 0 : i32
    %c0_i32_0 = arith.constant 0 : i32
    return %arg0, %c0_i32 : i32, i32
  }
  func.func @transform_2(%arg0: i32) -> (i32, i32) {
    %c0_i32 = arith.constant 0 : i32
    %c0_i32_0 = arith.constant 0 : i32
    return %arg0, %c0_i32 : i32, i32
  }
  func.func @transform_3(%arg0: i32) -> (i32, i32) {
    %c0_i32 = arith.constant 0 : i32
    %c0_i32_0 = arith.constant 0 : i32
    return %arg0, %c0_i32 : i32, i32
  }
  func.func @transform_4(%arg0: i32) -> (i32, i32) {
    %c0_i32 = arith.constant 0 : i32
    %c0_i32_0 = arith.constant 0 : i32
    return %arg0, %c0_i32 : i32, i32
  }
}

</mosaic_0001>

<llo_original>
// kernel: tpu_custom_call.1
$region0: #{tpu_custom_call.1}
  #allocation0 [shape = 'u32[]', space=smem, size = 0x4, offset = 0x4, fixed_abs, tag = 'smem constant byte address 0x4 - core index']
  #allocation1 [shape = 'u32[72,128]{1,0:T(1,128)}', space=vmem, size = 0x9000, scoped, tag = 'internal scratch']
  #allocation2 [shape = 'f32[1]{0:T(128)S(6)}', space=smem, size = 0x200, scoped, tag = 'scoped memory for tpu_custom_call.1']
  %s0 = inlined_call_operand.<no memory space> [shape: f32[1], index: 0, kind: input, shape index: {}]
  %s1 = inlined_call_operand.vmem [shape: f32[50,1], index: 1, kind: input, shape index: {}]
  %s2 = inlined_call_operand.vmem [shape: f32[50,50], index: 2, kind: input, shape index: {}]
  %s3 = inlined_call_operand.hbm [shape: f32[50,50], index: 3, kind: input, shape index: {}]
  %s4 = inlined_call_operand.vmem [shape: f32[50,1], index: 4, kind: output, shape index: {}]
  %s5 = sld [smem:[#allocation0]]
  $region30: #{tpu_custom_call.1} parent=0
    _
  %s7 = ssub.s32 1, %s5
  %s8 = scalar_select 0, %s7, %s5
  %9 = sst [smem:[#allocation2]] %s0
  $region1: #{tpu_custom_call.1} parent=0
    #allocation3 [shape = 'u8[28672]{0}', space=vmem, size = 0x7000, scoped, tag = 'input window, operand 3, single buffered']
    #allocation4 [shape = 's32[1]{0}', space=sflag, size = 0x4, scoped, tag = 'scoped memory for tpu_custom_call.1']
    %10 = vsyncpa [#allocation4], 0
    // Predicated region
    $region2: #{tpu_custom_call.1} parent=1 // pred_check
      _
    $region3: #{tpu_custom_call.1} parent=1 // pred_check_branch
      %12 = sbr.rel (0) target = $region5
    $region4: #{tpu_custom_call.1} parent=1 // pred_region
      _
    $region5: #{tpu_custom_call.1} parent=1 // pred_fallthru
      _
    // Predicated region
    $region6: #{tpu_custom_call.1} parent=1 // pred_check
      _
    $region7: #{tpu_custom_call.1} parent=1 // pred_check_branch
      %14 = sbr.rel (0) target = $region9
    $region8: #{tpu_custom_call.1} parent=1 // pred_region
      _
    $region9: #{tpu_custom_call.1} parent=1 // pred_fallthru
      _
    // Predicated region
    $region10: #{tpu_custom_call.1} parent=1 // pred_check
      _
    $region11: #{tpu_custom_call.1} parent=1 // pred_check_branch
      %16 = sbr.rel (0) target = $region13
    $region12: #{tpu_custom_call.1} parent=1 // pred_region
      _
    $region13: #{tpu_custom_call.1} parent=1 // pred_fallthru
      _
    // Predicated region
    $region14: #{tpu_custom_call.1} parent=1 // pred_check
      _
    $region15: #{tpu_custom_call.1} parent=1 // pred_check_branch
      %18 = sbr.rel (0) target = $region17
    $region16: #{tpu_custom_call.1} parent=1 // pred_region
      %20 = vsyncadd [#allocation4], 0
      %s21 = sshll.u32 %s3, 4
      %s22 = int_to_ptr.hbm [resolvable:$true] %s21
      %s23 = sshll.u32 [#allocation3], 4
      %s24 = int_to_ptr.vmem [resolvable:$true] %s23
      %29 = dma.hbm_to_vmem [thread:$0]  %s22, 896, %s24, [#allocation4], 128, 128, 8
    $region17: #{tpu_custom_call.1} parent=1 // pred_fallthru
      _
    // Predicated region
    $region18: #{tpu_custom_call.1} parent=1 // pred_check
      _
    $region19: #{tpu_custom_call.1} parent=1 // pred_check_branch
      %31 = sbr.rel (0) target = $region21
    $region20: #{tpu_custom_call.1} parent=1 // pred_region
      %33 = dma.done [#allocation4], 896
    $region21: #{tpu_custom_call.1} parent=1 // pred_fallthru
      _
    %s34 = sld [smem:[#allocation2]]
    %s35 = smul.f32 %s34, -0.5
    %s36 = smul.f32 %s35, %s34
    %v37 = vld [vmem:[%s1] sm:$0xff]
    %v38 = vld [vmem:[%s1 + $0x8] sm:$0xff]
    %v39 = vld [vmem:[%s1 + $0x10] sm:$0xff]
    %v40 = vld [vmem:[%s1 + $0x18] sm:$0xff]
    %v41 = vld [vmem:[%s1 + $0x20] sm:$0xff]
    %v42 = vld [vmem:[%s1 + $0x28] sm:$0xff]
    %v43 = vld [vmem:[%s1 + $0x30] sm:$0x3]
    %v44 = vld [vmem:[%s2] sm:$0xff]
    %v45 = vld [vmem:[%s2 + $0x8] sm:$0xff]
    %v46 = vld [vmem:[%s2 + $0x10] sm:$0xff]
    %v47 = vld [vmem:[%s2 + $0x18] sm:$0xff]
    %v48 = vld [vmem:[%s2 + $0x20] sm:$0xff]
    %v49 = vld [vmem:[%s2 + $0x28] sm:$0xff]
    %v50 = vld [vmem:[%s2 + $0x30] sm:$0x3]
    %v51 = vld [vmem:[#allocation3] sm:$0xff]
    %v52 = vld [vmem:[#allocation3 + $0x8] sm:$0xff]
    %v53 = vld [vmem:[#allocation3 + $0x10] sm:$0xff]
    %v54 = vld [vmem:[#allocation3 + $0x18] sm:$0xff]
    %v55 = vld [vmem:[#allocation3 + $0x20] sm:$0xff]
    %v56 = vld [vmem:[#allocation3 + $0x28] sm:$0xff]
    %v57 = vld [vmem:[#allocation3 + $0x30] sm:$0x3]
    %59 = vset.pattern.permute.xlu0 0
    %60 = vperm.xlu0 %59, %v37
    %v61 = vpop.permute.xlu0 %60
    %64 = vset.pattern.permute.xlu0 0
    %65 = vperm.xlu0 %64, %v38
    %v66 = vpop.permute.xlu0 %65
    %69 = vset.pattern.permute.xlu0 0
    %70 = vperm.xlu0 %69, %v39
    %v71 = vpop.permute.xlu0 %70
    %74 = vset.pattern.permute.xlu0 0
    %75 = vperm.xlu0 %74, %v40
    %v76 = vpop.permute.xlu0 %75
    %79 = vset.pattern.permute.xlu0 0
    %80 = vperm.xlu0 %79, %v41
    %v81 = vpop.permute.xlu0 %80
    %84 = vset.pattern.permute.xlu0 0
    %85 = vperm.xlu0 %84, %v42
    %v86 = vpop.permute.xlu0 %85
    %89 = vset.pattern.permute.xlu0 0
    %90 = vperm.xlu0 %89, %v43
    %v91 = vpop.permute.xlu0 %90
    %v93 = vsub.f32 %v61, %v44
    %v94 = vsub.f32 %v66, %v45
    %v95 = vsub.f32 %v71, %v46
    %v96 = vsub.f32 %v76, %v47
    %v97 = vsub.f32 %v81, %v48
    %v98 = vsub.f32 %v86, %v49
    %v99 = vsub.f32 %v91, %v50
    %v100 = vmul.f32 %v93, %v93
    %v101 = vmul.f32 %v94, %v94
    %v102 = vmul.f32 %v95, %v95
    %v103 = vmul.f32 %v96, %v96
    %v104 = vmul.f32 %v97, %v97
    %v105 = vmul.f32 %v98, %v98
    %v106 = vmul.f32 %v99, %v99
    %v107 = vstv %s36
    %v108 = vmul.f32 %v100, %v107
    %v109 = vmul.f32 %v101, %v107
    %v110 = vmul.f32 %v102, %v107
    %v111 = vmul.f32 %v103, %v107
    %v112 = vmul.f32 %v104, %v107
    %v113 = vmul.f32 %v105, %v107
    %v114 = vmul.f32 %v106, %v107
    %vm115 = vcmask 408576
    %v116 = vsel %vm115, %v108, -inf
    %117 = vmax.xlane.f32.xlu0 %v116
    %v118 = vpop.xlane.xlu0 %117
    %v119 = vsel %vm115, %v109, -inf
    %120 = vmax.xlane.f32.xlu0 %v119
    %v121 = vpop.xlane.xlu0 %120
    %v122 = vsel %vm115, %v110, -inf
    %123 = vmax.xlane.f32.xlu0 %v122
    %v124 = vpop.xlane.xlu0 %123
    %v125 = vsel %vm115, %v111, -inf
    %126 = vmax.xlane.f32.xlu0 %v125
    %v127 = vpop.xlane.xlu0 %126
    %v128 = vsel %vm115, %v112, -inf
    %129 = vmax.xlane.f32.xlu0 %v128
    %v130 = vpop.xlane.xlu0 %129
    %v131 = vsel %vm115, %v113, -inf
    %132 = vmax.xlane.f32.xlu0 %v131
    %v133 = vpop.xlane.xlu0 %132
    %vm134 = vcmask 402432
    %v135 = vsel %vm134, %v114, -inf
    %136 = vmax.xlane.f32.xlu0 %v135
    %v137 = vpop.xlane.xlu0 %136
    %v138 = vsub.f32 %v108, %v118
    %v139 = vsub.f32 %v109, %v121
    %v140 = vsub.f32 %v110, %v124
    %v141 = vsub.f32 %v111, %v127
    %v142 = vsub.f32 %v112, %v130
    %v143 = vsub.f32 %v113, %v133
    %v144 = vsub.f32 %v114, %v137
    %v145 = vmul.f32 %v138, 1.442695
    %v146 = vpow.pop %v145
    %v147 = vmul.f32 %v139, 1.442695
    %v148 = vpow.pop %v147
    %v149 = vmul.f32 %v140, 1.442695
    %v150 = vpow.pop %v149
    %v151 = vmul.f32 %v141, 1.442695
    %v152 = vpow.pop %v151
    %v153 = vmul.f32 %v142, 1.442695
    %v154 = vpow.pop %v153
    %v155 = vmul.f32 %v143, 1.442695
    %v156 = vpow.pop %v155
    %v157 = vmul.f32 %v144, 1.442695
    %v158 = vpow.pop %v157
    %v159 = vmul.f32 %v146, %v51
    %v160 = vmul.f32 %v148, %v52
    %v161 = vmul.f32 %v150, %v53
    %v162 = vmul.f32 %v152, %v54
    %v163 = vmul.f32 %v154, %v55
    %v164 = vmul.f32 %v156, %v56
    %v165 = vmul.f32 %v158, %v57
    %v166 = vsel %vm115, %v159, 0.0
    %167 = vadd.xlane.f32.xlu0 %v166
    %v168 = vpop.xlane.xlu0 %167
    %v169 = vsel %vm115, %v160, 0.0
    %170 = vadd.xlane.f32.xlu0 %v169
    %v171 = vpop.xlane.xlu0 %170
    %v172 = vsel %vm115, %v161, 0.0
    %173 = vadd.xlane.f32.xlu0 %v172
    %v174 = vpop.xlane.xlu0 %173
    %v175 = vsel %vm115, %v162, 0.0
    %176 = vadd.xlane.f32.xlu0 %v175
    %v177 = vpop.xlane.xlu0 %176
    %v178 = vsel %vm115, %v163, 0.0
    %179 = vadd.xlane.f32.xlu0 %v178
    %v180 = vpop.xlane.xlu0 %179
    %v181 = vsel %vm115, %v164, 0.0
    %182 = vadd.xlane.f32.xlu0 %v181
    %v183 = vpop.xlane.xlu0 %182
    %v184 = vsel %vm134, %v165, 0.0
    %185 = vadd.xlane.f32.xlu0 %v184
    %v186 = vpop.xlane.xlu0 %185
    %v187 = vsel %vm115, %v146, 0.0
    %188 = vadd.xlane.f32.xlu0 %v187
    %v189 = vpop.xlane.xlu0 %188
    %v190 = vsel %vm115, %v148, 0.0
    %191 = vadd.xlane.f32.xlu0 %v190
    %v192 = vpop.xlane.xlu0 %191
    %v193 = vsel %vm115, %v150, 0.0
    %194 = vadd.xlane.f32.xlu0 %v193
    %v195 = vpop.xlane.xlu0 %194
    %v196 = vsel %vm115, %v152, 0.0
    %197 = vadd.xlane.f32.xlu0 %v196
    %v198 = vpop.xlane.xlu0 %197
    %v199 = vsel %vm115, %v154, 0.0
    %200 = vadd.xlane.f32.xlu0 %v199
    %v201 = vpop.xlane.xlu0 %200
    %v202 = vsel %vm115, %v156, 0.0
    %203 = vadd.xlane.f32.xlu0 %v202
    %v204 = vpop.xlane.xlu0 %203
    %v205 = vsel %vm134, %v158, 0.0
    %206 = vadd.xlane.f32.xlu0 %v205
    %v207 = vpop.xlane.xlu0 %206
    %v208 = vrcp.pop %v189
    %v209 = vmul.f32 %v189, %v208
    %v210 = vsub.f32 1.0, %v209
    %v211 = vmul.f32 %v208, %v210
    %v212 = vadd.f32 %v208, %v211
    %vm213 = vweird.f32 %v189
    %vm214 = vweird.f32 %v208
    %vm215 = vmor %vm213, %vm214
    %v216 = vsel %vm215, %v208, %v212
    %v217 = vand.u32 2147483647, %v189
    %vm218 = vcmp.eq.f32.partialorder %v217, 8.507059e+37
    %v219 = vand.u32 %v189, 2147483648
    %v220 = vor.u32 1.1754944e-38, %v219
    %v221 = vsel %vm218, %v220, %v216
    %v222 = vmul.f32 %v168, %v221
    %v223 = vrcp.pop %v192
    %v224 = vmul.f32 %v192, %v223
    %v225 = vsub.f32 1.0, %v224
    %v226 = vmul.f32 %v223, %v225
    %v227 = vadd.f32 %v223, %v226
    %vm228 = vweird.f32 %v192
    %vm229 = vweird.f32 %v223
    %vm230 = vmor %vm228, %vm229
    %v231 = vsel %vm230, %v223, %v227
    %v232 = vand.u32 2147483647, %v192
    %vm233 = vcmp.eq.f32.partialorder %v232, 8.507059e+37
    %v234 = vand.u32 %v192, 2147483648
    %v235 = vor.u32 1.1754944e-38, %v234
    %v236 = vsel %vm233, %v235, %v231
    %v237 = vmul.f32 %v171, %v236
    %v238 = vrcp.pop %v195
    %v239 = vmul.f32 %v195, %v238
    %v240 = vsub.f32 1.0, %v239
    %v241 = vmul.f32 %v238, %v240
    %v242 = vadd.f32 %v238, %v241
    %vm243 = vweird.f32 %v195
    %vm244 = vweird.f32 %v238
    %vm245 = vmor %vm243, %vm244
    %v246 = vsel %vm245, %v238, %v242
    %v247 = vand.u32 2147483647, %v195
    %vm248 = vcmp.eq.f32.partialorder %v247, 8.507059e+37
    %v249 = vand.u32 %v195, 2147483648
    %v250 = vor.u32 1.1754944e-38, %v249
    %v251 = vsel %vm248, %v250, %v246
    %v252 = vmul.f32 %v174, %v251
    %v253 = vrcp.pop %v198
    %v254 = vmul.f32 %v198, %v253
    %v255 = vsub.f32 1.0, %v254
    %v256 = vmul.f32 %v253, %v255
    %v257 = vadd.f32 %v253, %v256
    %vm258 = vweird.f32 %v198
    %vm259 = vweird.f32 %v253
    %vm260 = vmor %vm258, %vm259
    %v261 = vsel %vm260, %v253, %v257
    %v262 = vand.u32 2147483647, %v198
    %vm263 = vcmp.eq.f32.partialorder %v262, 8.507059e+37
    %v264 = vand.u32 %v198, 2147483648
    %v265 = vor.u32 1.1754944e-38, %v264
    %v266 = vsel %vm263, %v265, %v261
    %v267 = vmul.f32 %v177, %v266
    %v268 = vrcp.pop %v201
    %v269 = vmul.f32 %v201, %v268
    %v270 = vsub.f32 1.0, %v269
    %v271 = vmul.f32 %v268, %v270
    %v272 = vadd.f32 %v268, %v271
    %vm273 = vweird.f32 %v201
    %vm274 = vweird.f32 %v268
    %vm275 = vmor %vm273, %vm274
    %v276 = vsel %vm275, %v268, %v272
    %v277 = vand.u32 2147483647, %v201
    %vm278 = vcmp.eq.f32.partialorder %v277, 8.507059e+37
    %v279 = vand.u32 %v201, 2147483648
    %v280 = vor.u32 1.1754944e-38, %v279
    %v281 = vsel %vm278, %v280, %v276
    %v282 = vmul.f32 %v180, %v281
    %v283 = vrcp.pop %v204
    %v284 = vmul.f32 %v204, %v283
    %v285 = vsub.f32 1.0, %v284
    %v286 = vmul.f32 %v283, %v285
    %v287 = vadd.f32 %v283, %v286
    %vm288 = vweird.f32 %v204
    %vm289 = vweird.f32 %v283
    %vm290 = vmor %vm288, %vm289
    %v291 = vsel %vm290, %v283, %v287
    %v292 = vand.u32 2147483647, %v204
    %vm293 = vcmp.eq.f32.partialorder %v292, 8.507059e+37
    %v294 = vand.u32 %v204, 2147483648
    %v295 = vor.u32 1.1754944e-38, %v294
    %v296 = vsel %vm293, %v295, %v291
    %v297 = vmul.f32 %v183, %v296
    %v298 = vrcp.pop %v207
    %v299 = vmul.f32 %v207, %v298
    %v300 = vsub.f32 1.0, %v299
    %v301 = vmul.f32 %v298, %v300
    %v302 = vadd.f32 %v298, %v301
    %vm303 = vweird.f32 %v207
    %vm304 = vweird.f32 %v298
    %vm305 = vmor %vm303, %vm304
    %v306 = vsel %vm305, %v298, %v302
    %v307 = vand.u32 2147483647, %v207
    %vm308 = vcmp.eq.f32.partialorder %v307, 8.507059e+37
    %v309 = vand.u32 %v207, 2147483648
    %v310 = vor.u32 1.1754944e-38, %v309
    %v311 = vsel %vm308, %v310, %v306
    %v312 = vmul.f32 %v186, %v311
    %vm313 = vcmask 7168
    %314 = vst.msk [vmem:[%s4] sm:$0xff] %vm313, %v222
    %315 = vst.msk [vmem:[%s4 + $0x8] sm:$0xff] %vm313, %v237
    %316 = vst.msk [vmem:[%s4 + $0x10] sm:$0xff] %vm313, %v252
    %317 = vst.msk [vmem:[%s4 + $0x18] sm:$0xff] %vm313, %v267
    %318 = vst.msk [vmem:[%s4 + $0x20] sm:$0xff] %vm313, %v282
    %319 = vst.msk [vmem:[%s4 + $0x28] sm:$0xff] %vm313, %v297
    %vm320 = vcmask 1024
    %321 = vst.msk [vmem:[%s4 + $0x30] sm:$0x3] %vm320, %v312
    // Predicated region
    $region22: #{tpu_custom_call.1} parent=1 // pred_check
      _
    $region23: #{tpu_custom_call.1} parent=1 // pred_check_branch
      %323 = sbr.rel (0) target = $region25
    $region24: #{tpu_custom_call.1} parent=1 // pred_region
      _
    $region25: #{tpu_custom_call.1} parent=1 // pred_fallthru
      _
    // Predicated region
    $region26: #{tpu_custom_call.1} parent=1 // pred_check
      _
    $region27: #{tpu_custom_call.1} parent=1 // pred_check_branch
      %325 = sbr.rel (0) target = $region29
    $region28: #{tpu_custom_call.1} parent=1 // pred_region
      _
    $region29: #{tpu_custom_call.1} parent=1 // pred_fallthru
      _
    %326 = vsyncpa [#allocation4], 1

</llo_original>
